<compile_context>
chip_gen: v6e
topology: v6e:2x2x1
jax: 0.10.0
libtpu: 0.0.40
codegen_flags: <defaults>
</compile_context>

<pallas_src>
import functools

import numpy as np
import jax
import jax.numpy as jnp
from jax.experimental import pallas as pl
from jax.experimental.pallas import tpu as pltpu

IN_DIM = 1
OUT_DIM = 12
PIC_SIZE = 36
HW = int(PIC_SIZE ** 0.5)          # 6
MID_CH = 3 * IN_DIM                # 3
MID_DIM = MID_CH * PIC_SIZE        # 108

G = 2                              # images packed per matmul row (block-diag folded weights)
_ROW_ALIGN = 16                    # bf16 sublane packing: row-tile multiple of 16
_ROW_CAP = 2048                    # max matmul rows per grid step (= 4096 images)


# ----------------------------------------------------------------------------
# Parameter setup (plain numpy/JAX glue, runs once).
# ----------------------------------------------------------------------------
def _conv_to_toeplitz(w):
    """w: (out_ch, in_ch, 3, 3) -> T: (in_ch*36, out_ch*36) for 3x3, pad=1, stride=1."""
    out_ch, in_ch = w.shape[0], w.shape[1]
    t = np.zeros((in_ch * PIC_SIZE, out_ch * PIC_SIZE), dtype=np.float32)
    for o in range(out_ch):
        for c in range(in_ch):
            for io in range(HW):
                for jo in range(HW):
                    q = io * HW + jo
                    for di in range(3):
                        for dj in range(3):
                            ii = io + di - 1
                            ji = jo + dj - 1
                            if 0 <= ii < HW and 0 <= ji < HW:
                                p = ii * HW + ji
                                t[c * PIC_SIZE + p, o * PIC_SIZE + q] = w[o, c, di, dj]
    return t


def _blockdiag(a, g):
    r, c = a.shape
    out = np.zeros((g * r, g * c), dtype=a.dtype)
    for k in range(g):
        out[k * r:(k + 1) * r, k * c:(k + 1) * c] = a
    return out


def make_params(key):
    k = jax.random.split(key, 6)
    w1 = jax.random.uniform(k[0], (MID_CH, IN_DIM, 3, 3), jnp.float32, -0.3, 0.3)
    b1 = jax.random.uniform(k[1], (MID_CH,), jnp.float32, -0.3, 0.3)
    w2 = jax.random.uniform(k[2], (IN_DIM, MID_CH, 3, 3), jnp.float32, -0.2, 0.2)
    b2 = jax.random.uniform(k[3], (IN_DIM,), jnp.float32, -0.2, 0.2)
    w3 = jax.random.uniform(k[4], (OUT_DIM, PIC_SIZE), jnp.float32, -0.15, 0.15)
    b3 = jax.random.uniform(k[5], (OUT_DIM,), jnp.float32, -0.15, 0.15)
    return w1, b1, w2, b2, w3, b3


def fold_params(w1, b1, w2, b2, w3, b3, g=G):
    """Fold convs to Toeplitz form and block-diagonalize for G images per matmul row.
    Matmul operands in bf16 (MXU-native, exact fold otherwise); biases stay f32."""
    t1 = _conv_to_toeplitz(np.asarray(w1))                    # (36, 108)
    t2 = _conv_to_toeplitz(np.asarray(w2))                    # (108, 36)
    w3t = np.asarray(w3, np.float32).T                        # (36, 12)
    b1f = np.repeat(np.asarray(b1, np.float32), PIC_SIZE)     # (108,)
    b2f = np.repeat(np.asarray(b2, np.float32), PIC_SIZE)     # (36,)
    b3f = np.asarray(b3, np.float32)                          # (12,)

    t1g = jnp.asarray(_blockdiag(t1, g), jnp.bfloat16)        # (72, 216)
    t2g = jnp.asarray(_blockdiag(t2, g), jnp.bfloat16)        # (216, 72)
    w3g = jnp.asarray(_blockdiag(w3t, g), jnp.bfloat16)       # (72, 24)
    b1g = jnp.asarray(np.tile(b1f, g)[None, :], jnp.float32)  # (1, 216)
    b2g = jnp.asarray(np.tile(b2f, g)[None, :], jnp.float32)  # (1, 72)
    b3g = jnp.asarray(np.tile(b3f, g)[None, :], jnp.float32)  # (1, 24)
    return t1g, b1g, t2g, b2g, w3g, b3g


# ----------------------------------------------------------------------------
# Pallas kernel: whole forward (3 matmuls + bias + ReLU) on one batch-row tile.
# bf16 MXU operands, f32 accumulation / bias / output.  Each matmul row carries
# G=2 images; the folded weights are block-diagonal so rows stay independent.
# ----------------------------------------------------------------------------
def baseconv_kernel(x_ref, t1_ref, b1_ref, t2_ref, b2_ref, w3_ref, b3_ref, o_ref):
    x = x_ref[...].astype(jnp.bfloat16)                                          # (tr, 72)
    h1 = jnp.dot(x, t1_ref[...], preferred_element_type=jnp.float32) + b1_ref[...]
    h1 = jnp.maximum(h1, 0.0).astype(jnp.bfloat16)                               # conv1 + ReLU
    h2 = jnp.dot(h1, t2_ref[...], preferred_element_type=jnp.float32) + b2_ref[...]
    h2 = jnp.maximum(h2, 0.0).astype(jnp.bfloat16)                               # conv2 + ReLU
    y = jnp.dot(h2, w3_ref[...], preferred_element_type=jnp.float32) + b3_ref[...]
    o_ref[...] = y.astype(o_ref.dtype)                                           # linear (tr, 24)


def _round_up(v, a):
    return -(-v // a) * a


def _pick_tile_rows(m, cap=_ROW_CAP):
    """Pick the matmul-row tile.  Small batches: single full block.  Medium: split
    in two (>=2 grid steps so v7x can shard the parallel axis over its 2 TCs).
    Large: biggest tile <= cap with an even grid-step count."""
    cap = max(_ROW_ALIGN, (cap // _ROW_ALIGN) * _ROW_ALIGN)
    if m <= _ROW_ALIGN:
        return m                                   # one full-array block
    if m <= cap:
        half = _round_up(m, 2) // 2
        return min(cap, _round_up(half, _ROW_ALIGN))
    steps = pl.cdiv(m, cap)
    if steps % 2:
        steps += 1                                 # even steps -> both v7x TCs busy
    return _round_up(pl.cdiv(m, steps), _ROW_ALIGN)


@functools.partial(jax.jit, static_argnames=("row_cap",))
def baseconv_forward(x, t1g, b1g, t2g, b2g, w3g, b3g, row_cap=_ROW_CAP):
    x = x.reshape(-1, PIC_SIZE)                    # mirrors reshape(-1,1,6,6) flatten
    n = x.shape[0]
    if n % G:                                      # odd batch: 1-row pad (only copy on this path)
        x = jnp.pad(x, ((0, G - n % G), (0, 0)))
    xg = x.reshape(-1, G * PIC_SIZE)               # (m, 72): free, same row-major bytes
    m = xg.shape[0]
    tr = _pick_tile_rows(m, row_cap)               # static at trace time
    grid = (pl.cdiv(m, tr),)                       # uneven last block handled by Pallas:
                                                   # OOB input rows are don't-care, OOB output
                                                   # rows clipped (rows are independent).
    out = pl.pallas_call(
        baseconv_kernel,
        out_shape=jax.ShapeDtypeStruct((m, G * OUT_DIM), jnp.float32),
        grid=grid,
        in_specs=[
            pl.BlockSpec((tr, G * PIC_SIZE), lambda i: (i, 0)),        # x tile (streamed)
            pl.BlockSpec((G * PIC_SIZE, G * MID_DIM), lambda i: (0, 0)),   # T1 blockdiag (resident)
            pl.BlockSpec((1, G * MID_DIM), lambda i: (0, 0)),              # b1 (resident)
            pl.BlockSpec((G * MID_DIM, G * PIC_SIZE), lambda i: (0, 0)),   # T2 blockdiag (resident)
            pl.BlockSpec((1, G * PIC_SIZE), lambda i: (0, 0)),             # b2 (resident)
            pl.BlockSpec((G * PIC_SIZE, G * OUT_DIM), lambda i: (0, 0)),   # W3t blockdiag (resident)
            pl.BlockSpec((1, G * OUT_DIM), lambda i: (0, 0)),              # b3 (resident)
        ],
        out_specs=pl.BlockSpec((tr, G * OUT_DIM), lambda i: (i, 0)),
        compiler_params=pltpu.CompilerParams(
            dimension_semantics=("parallel",),
            vmem_limit_bytes=32 * 1024 * 1024,     # ~11 MiB used at tr=2048; raises v5e default
        ),
    )(xg, t1g, b1g, t2g, b2g, w3g, b3g)
    out = out.reshape(-1, OUT_DIM)                 # free: identical row-major bytes
    if out.shape[0] != n:                          # only when the batch was odd
        out = out[:n]
    return out


# ----------------------------------------------------------------------------
# Pure-JAX f32 reference of the PyTorch forward (NCHW convs), used as a sanity check.
# ----------------------------------------------------------------------------
def ref_forward(x, w1, b1, w2, b2, w3, b3):
    xi = x.reshape(-1, IN_DIM, HW, HW)
    dn = ("NCHW", "OIHW", "NCHW")
    h = jax.lax.conv_general_dilated(xi, w1, (1, 1), "SAME", dimension_numbers=dn)
    h = jax.nn.relu(h + b1.reshape(1, MID_CH, 1, 1))
    h = jax.lax.conv_general_dilated(h, w2, (1, 1), "SAME", dimension_numbers=dn)
    h = jax.nn.relu(h + b2.reshape(1, IN_DIM, 1, 1))
    return h.reshape(-1, PIC_SIZE) @ w3.T + b3


if __name__ == "__main__":
    key = jax.random.PRNGKey(0)
    kx, kp = jax.random.split(key)

    w1, b1, w2, b2, w3, b3 = make_params(kp)
    folded = fold_params(w1, b1, w2, b2, w3, b3)

    # Small shapes: tiny single-tile batch, a ragged odd batch (exercises the 1-row pad
    # and the uneven last grid block), and a multi-tile even batch.
    for batch in (4, 37, 200):
        x = jax.random.normal(jax.random.fold_in(kx, batch), (batch, PIC_SIZE), jnp.float32)
        out = jax.block_until_ready(baseconv_forward(x, *folded))
        assert out.shape == (batch, OUT_DIM), out.shape

        ref = ref_forward(x, w1, b1, w2, b2, w3, b3)
        # bf16 matmul operands + f32 accumulation -> loosened tolerance vs. f32 reference.
        np.testing.assert_allclose(np.asarray(out), np.asarray(ref), rtol=3e-2, atol=3e-2)

    print("KERNEL_OK")
</pallas_src>

<mosaic_0001>
module attributes {stable_mosaic.version = 11 : i64} {
  func.func @baseconv_kernel(%arg0: i32, %arg1: memref<2x72xf32, #tpu.memory_space<vmem>>, %arg2: memref<72x216xbf16, #tpu.memory_space<vmem>>, %arg3: memref<1x216xf32, #tpu.memory_space<vmem>>, %arg4: memref<216x72xbf16, #tpu.memory_space<vmem>>, %arg5: memref<1x72xf32, #tpu.memory_space<vmem>>, %arg6: memref<72x24xbf16, #tpu.memory_space<vmem>>, %arg7: memref<1x24xf32, #tpu.memory_space<vmem>>, %arg8: memref<2x24xf32, #tpu.memory_space<vmem>>) attributes {dimension_semantics = [#tpu.dimension_semantics<parallel>], iteration_bounds = array<i64: 1>, scalar_prefetch = 0 : i64, scratch_operands = 0 : i64, tpu.core_type = #tpu.core_type<tc>, window_params = [{transform_indices = @transform_0, window_bounds = array<i64: 2, 72>}, {pipeline_mode = #tpu.pipeline_mode<synchronous>, transform_indices = @transform_1, window_bounds = array<i64: 72, 216>}, {pipeline_mode = #tpu.pipeline_mode<synchronous>, transform_indices = @transform_2, window_bounds = array<i64: 1, 216>}, {pipeline_mode = #tpu.pipeline_mode<synchronous>, transform_indices = @transform_3, window_bounds = array<i64: 216, 72>}, {pipeline_mode = #tpu.pipeline_mode<synchronous>, transform_indices = @transform_4, window_bounds = array<i64: 1, 72>}, {pipeline_mode = #tpu.pipeline_mode<synchronous>, transform_indices = @transform_5, window_bounds = array<i64: 72, 24>}, {pipeline_mode = #tpu.pipeline_mode<synchronous>, transform_indices = @transform_6, window_bounds = array<i64: 1, 24>}, {transform_indices = @transform_7, window_bounds = array<i64: 2, 24>}]} {
    %c0 = arith.constant 0 : index
    %c0_0 = arith.constant 0 : index
    %0 = vector.load %arg1[%c0, %c0_0] : memref<2x72xf32, #tpu.memory_space<vmem>>, vector<2x72xf32>
    %1 = arith.truncf %0 : vector<2x72xf32> to vector<2x72xbf16>
    %c0_1 = arith.constant 0 : index
    %c0_2 = arith.constant 0 : index
    %2 = vector.load %arg2[%c0_1, %c0_2] : memref<72x216xbf16, #tpu.memory_space<vmem>>, vector<72x216xbf16>
    %cst = arith.constant dense<0.000000e+00> : vector<2x216xf32>
    %3 = tpu.matmul %1, %2, %cst {dimension_numbers = #tpu.dot_dimension_numbers<[1], [0], [0], [1], [0, 0, 1, 1], [], []>} : vector<2x72xbf16>, vector<72x216xbf16>, vector<2x216xf32> -> vector<2x216xf32>
    %c0_3 = arith.constant 0 : index
    %c0_4 = arith.constant 0 : index
    %4 = vector.load %arg3[%c0_3, %c0_4] : memref<1x216xf32, #tpu.memory_space<vmem>>, vector<1x216xf32>
    %5 = vector.broadcast %4 : vector<1x216xf32> to vector<2x216xf32>
    %6 = arith.addf %3, %5 : vector<2x216xf32>
    %cst_5 = arith.constant 0.000000e+00 : f32
    %7 = vector.broadcast %cst_5 : f32 to vector<2x216xf32>
    %8 = arith.maximumf %6, %7 : vector<2x216xf32>
    %9 = arith.truncf %8 : vector<2x216xf32> to vector<2x216xbf16>
    %c0_6 = arith.constant 0 : index
    %c0_7 = arith.constant 0 : index
    %10 = vector.load %arg4[%c0_6, %c0_7] : memref<216x72xbf16, #tpu.memory_space<vmem>>, vector<216x72xbf16>
    %cst_8 = arith.constant dense<0.000000e+00> : vector<2x72xf32>
    %11 = tpu.matmul %9, %10, %cst_8 {dimension_numbers = #tpu.dot_dimension_numbers<[1], [0], [0], [1], [0, 0, 1, 1], [], []>} : vector<2x216xbf16>, vector<216x72xbf16>, vector<2x72xf32> -> vector<2x72xf32>
    %c0_9 = arith.constant 0 : index
    %c0_10 = arith.constant 0 : index
    %12 = vector.load %arg5[%c0_9, %c0_10] : memref<1x72xf32, #tpu.memory_space<vmem>>, vector<1x72xf32>
    %13 = vector.broadcast %12 : vector<1x72xf32> to vector<2x72xf32>
    %14 = arith.addf %11, %13 : vector<2x72xf32>
    %cst_11 = arith.constant 0.000000e+00 : f32
    %15 = vector.broadcast %cst_11 : f32 to vector<2x72xf32>
    %16 = arith.maximumf %14, %15 : vector<2x72xf32>
    %17 = arith.truncf %16 : vector<2x72xf32> to vector<2x72xbf16>
    %c0_12 = arith.constant 0 : index
    %c0_13 = arith.constant 0 : index
    %18 = vector.load %arg6[%c0_12, %c0_13] : memref<72x24xbf16, #tpu.memory_space<vmem>>, vector<72x24xbf16>
    %cst_14 = arith.constant dense<0.000000e+00> : vector<2x24xf32>
    %19 = tpu.matmul %17, %18, %cst_14 {dimension_numbers = #tpu.dot_dimension_numbers<[1], [0], [0], [1], [0, 0, 1, 1], [], []>} : vector<2x72xbf16>, vector<72x24xbf16>, vector<2x24xf32> -> vector<2x24xf32>
    %c0_15 = arith.constant 0 : index
    %c0_16 = arith.constant 0 : index
    %20 = vector.load %arg7[%c0_15, %c0_16] : memref<1x24xf32, #tpu.memory_space<vmem>>, vector<1x24xf32>
    %21 = vector.broadcast %20 : vector<1x24xf32> to vector<2x24xf32>
    %22 = arith.addf %19, %21 : vector<2x24xf32>
    %c0_17 = arith.constant 0 : index
    %c0_18 = arith.constant 0 : index
    %23 = vector.load %arg8[%c0_17, %c0_18] : memref<2x24xf32, #tpu.memory_space<vmem>>, vector<2x24xf32>
    tpu.vector_store %arg8[%c0_17, %c0_18], %22 {strides = array<i32>} : memref<2x24xf32, #tpu.memory_space<vmem>>, vector<2x24xf32>,
    return
  }
  func.func @transform_0(%arg0: i32) -> (i32, i32) {
    %c0_i32 = arith.constant 0 : i32
    %c0_i32_0 = arith.constant 0 : i32
    return %arg0, %c0_i32 : i32, i32
  }
  func.func @transform_1(%arg0: i32) -> (i32, i32) {
    %c0_i32 = arith.constant 0 : i32
    %c0_i32_0 = arith.constant 0 : i32
    %c0_i32_1 = arith.constant 0 : i32
    return %c0_i32, %c0_i32_0 : i32, i32
  }
  func.func @transform_2(%arg0: i32) -> (i32, i32) {
    %c0_i32 = arith.constant 0 : i32
    %c0_i32_0 = arith.constant 0 : i32
    %c0_i32_1 = arith.constant 0 : i32
    return %c0_i32, %c0_i32_0 : i32, i32
  }
  func.func @transform_3(%arg0: i32) -> (i32, i32) {
    %c0_i32 = arith.constant 0 : i32
    %c0_i32_0 = arith.constant 0 : i32
    %c0_i32_1 = arith.constant 0 : i32
    return %c0_i32, %c0_i32_0 : i32, i32
  }
  func.func @transform_4(%arg0: i32) -> (i32, i32) {
    %c0_i32 = arith.constant 0 : i32
    %c0_i32_0 = arith.constant 0 : i32
    %c0_i32_1 = arith.constant 0 : i32
    return %c0_i32, %c0_i32_0 : i32, i32
  }
  func.func @transform_5(%arg0: i32) -> (i32, i32) {
    %c0_i32 = arith.constant 0 : i32
    %c0_i32_0 = arith.constant 0 : i32
    %c0_i32_1 = arith.constant 0 : i32
    return %c0_i32, %c0_i32_0 : i32, i32
  }
  func.func @transform_6(%arg0: i32) -> (i32, i32) {
    %c0_i32 = arith.constant 0 : i32
    %c0_i32_0 = arith.constant 0 : i32
    %c0_i32_1 = arith.constant 0 : i32
    return %c0_i32, %c0_i32_0 : i32, i32
  }
  func.func @transform_7(%arg0: i32) -> (i32, i32) {
    %c0_i32 = arith.constant 0 : i32
    %c0_i32_0 = arith.constant 0 : i32
    return %arg0, %c0_i32 : i32, i32
  }
}

</mosaic_0001>

<llo_original>
// kernel: baseconv_forward.1
$region0: #{baseconv_forward.1}
  #allocation0 [shape = 'u32[]', space=smem, size = 0x4, offset = 0x4, fixed_abs, tag = 'smem constant byte address 0x4 - core index']
  #allocation1 [shape = 'u32[144,128]{1,0:T(1,128)}', space=vmem, size = 0x12000, scoped, tag = 'internal scratch']
  %s0 = inlined_call_operand.vmem [shape: f32[2,72], index: 0, kind: input, shape index: {}]
  %s1 = inlined_call_operand.vmem [shape: bf16[72,216], index: 1, kind: input, shape index: {}]
  %s2 = inlined_call_operand.vmem [shape: f32[1,216], index: 2, kind: input, shape index: {}]
  %s3 = inlined_call_operand.vmem [shape: bf16[216,72], index: 3, kind: input, shape index: {}]
  %s4 = inlined_call_operand.vmem [shape: f32[1,72], index: 4, kind: input, shape index: {}]
  %s5 = inlined_call_operand.vmem [shape: bf16[72,24], index: 5, kind: input, shape index: {}]
  %s6 = inlined_call_operand.vmem [shape: f32[1,24], index: 6, kind: input, shape index: {}]
  %s7 = inlined_call_operand.vmem [shape: f32[2,24], index: 7, kind: output, shape index: {}]
  %s8 = sld [smem:[#allocation0]]
  $region38: #{baseconv_forward.1} parent=0
    _
  %s10 = ssub.s32 1, %s8
  %s11 = scalar_select 0, %s10, %s8
  // Predicated region
  $region2: #{baseconv_forward.1} parent=0 // pred_check
    _
  $region3: #{baseconv_forward.1} parent=0 // pred_check_branch
    %13 = sbr.rel (0) target = $region5
  $region4: #{baseconv_forward.1} parent=0 // pred_region
    _
  $region5: #{baseconv_forward.1} parent=0 // pred_fallthru
    _
  // Predicated region
  $region6: #{baseconv_forward.1} parent=0 // pred_check
    _
  $region7: #{baseconv_forward.1} parent=0 // pred_check_branch
    %15 = sbr.rel (0) target = $region9
  $region8: #{baseconv_forward.1} parent=0 // pred_region
    _
  $region9: #{baseconv_forward.1} parent=0 // pred_fallthru
    _
  // Predicated region
  $region10: #{baseconv_forward.1} parent=0 // pred_check
    _
  $region11: #{baseconv_forward.1} parent=0 // pred_check_branch
    %17 = sbr.rel (0) target = $region13
  $region12: #{baseconv_forward.1} parent=0 // pred_region
    _
  $region13: #{baseconv_forward.1} parent=0 // pred_fallthru
    _
  // Predicated region
  $region14: #{baseconv_forward.1} parent=0 // pred_check
    _
  $region15: #{baseconv_forward.1} parent=0 // pred_check_branch
    %19 = sbr.rel (0) target = $region17
  $region16: #{baseconv_forward.1} parent=0 // pred_region
    _
  $region17: #{baseconv_forward.1} parent=0 // pred_fallthru
    _
  // Predicated region
  $region18: #{baseconv_forward.1} parent=0 // pred_check
    _
  $region19: #{baseconv_forward.1} parent=0 // pred_check_branch
    %21 = sbr.rel (0) target = $region21
  $region20: #{baseconv_forward.1} parent=0 // pred_region
    _
  $region21: #{baseconv_forward.1} parent=0 // pred_fallthru
    _
  // Predicated region
  $region22: #{baseconv_forward.1} parent=0 // pred_check
    _
  $region23: #{baseconv_forward.1} parent=0 // pred_check_branch
    %23 = sbr.rel (0) target = $region25
  $region24: #{baseconv_forward.1} parent=0 // pred_region
    _
  $region25: #{baseconv_forward.1} parent=0 // pred_fallthru
    _
  // Predicated region
  $region26: #{baseconv_forward.1} parent=0 // pred_check
    _
  $region27: #{baseconv_forward.1} parent=0 // pred_check_branch
    %25 = sbr.rel (0) target = $region29
  $region28: #{baseconv_forward.1} parent=0 // pred_region
    _
  $region29: #{baseconv_forward.1} parent=0 // pred_fallthru
    _
  %v27 = vld [vmem:[%s0] sm:$0x3]
  %v28 = vpack.c.bf16 %v27, %v27
  %v29 = vld [vmem:[%s1] sm:$0xff]
  %v30 = vld [vmem:[%s1 + $0x8] sm:$0xff]
  %v31 = vld [vmem:[%s1 + $0x10] sm:$0xff]
  %v32 = vld [vmem:[%s1 + $0x18] sm:$0xff]
  %v33 = vld [vmem:[%s1 + $0x20] sm:$0xff]
  %v34 = vld [vmem:[%s1 + $0x28] sm:$0xff]
  %v35 = vld [vmem:[%s1 + $0x30] sm:$0xff]
  %v36 = vld [vmem:[%s1 + $0x38] sm:$0xff]
  %v37 = vld [vmem:[%s1 + $0x40] sm:$0xff]
  %v38 = vld [vmem:[%s2] sm:$0x3]
  %v40 = vlaneseq
  %v41 = vshrl.u32 %v40, 7
  %v42 = vsub.s32 0, %v41
  %v43 = vrot.slane %v38, %v42
  %v44 = vlaneseq
  %v45 = vshrl.u32 %v44, 7
  %v46 = vsub.s32 1, %v45
  %v47 = vrot.slane %v38, %v46
  %v59 = vunpack.c.l.b16 %v29
  %v60 = vunpack.c.h.b16 %v29
  %v61 = vunpack.c.l.b16 %v30
  %v62 = vunpack.c.h.b16 %v30
  %v63 = vunpack.c.l.b16 %v31
  %v64 = vunpack.c.h.b16 %v31
  %v65 = vunpack.c.l.b16 %v32
  %v66 = vunpack.c.h.b16 %v32
  %v67 = vunpack.c.l.b16 %v33
  %v68 = vunpack.c.h.b16 %v33
  %v69 = vunpack.c.l.b16 %v34
  %v70 = vunpack.c.h.b16 %v34
  %v71 = vunpack.c.l.b16 %v35
  %v72 = vunpack.c.h.b16 %v35
  %v73 = vunpack.c.l.b16 %v36
  %v74 = vunpack.c.h.b16 %v36
  %v75 = vunpack.c.l.b16 %v37
  %v76 = vunpack.c.h.b16 %v37
  %v77 = vpack.c.b16 %v61, %v59
  %v78 = vpack.c.b16 %v62, %v60
  %v79 = vpack.c.b16 %v65, %v63
  %v80 = vpack.c.b16 %v66, %v64
  %v81 = vpack.c.b16 %v69, %v67
  %v82 = vpack.c.b16 %v70, %v68
  %v83 = vpack.c.b16 %v73, %v71
  %v84 = vpack.c.b16 %v74, %v72
  %v85 = vpack.c.b16 %v75, %v75
  %v86 = vpack.c.b16 %v76, %v76
  %vm95 = vcmask 588800
  %v97 = vsel %vm95, %v28, 0
  %vm99 = vcmask 1043456
  %v101 = vsel %vm99, %v85, 0
  %v104 = vsel %vm99, %v86, 0
  %106 = vmatprep.subr.bf16.mxu0 0
  %107 = vmatpush1.bf16.msra.mxu0 0
  %108 = vmatprep.subr.bf16.mxu0 0
  %109 = vmatpush1.bf16.msra.mxu0 0
  %110 = vmatprep.subr.bf16.mxu0 0
  %111 = vmatpush1.bf16.msra.mxu0 0
  %112 = vmatprep.subr.bf16.mxu0 %v104
  %113 = vmatpush1.bf16.msra.mxu0 %v101
  %114 = vmatprep.subr.bf16.mxu0 %v84
  %115 = vmatpush1.bf16.msra.mxu0 %v83
  %116 = vmatprep.subr.bf16.mxu0 %v82
  %117 = vmatpush1.bf16.msra.mxu0 %v81
  %118 = vmatprep.subr.bf16.mxu0 %v80
  %119 = vmatpush1.bf16.msra.mxu0 %v79
  %120 = vmatprep.subr.bf16.mxu0 %v78
  %121 = vmatpush1.bf16.msra.mxu0 %v77
  %122 = vmatprep.subr.bf16.mxu0 0
  %123 = vmatpush2.bf16.msra.mxu0 0
  %124 = vmatprep.subr.bf16.mxu0 0
  %125 = vmatpush2.bf16.msra.mxu0 0
  %126 = vmatprep.subr.bf16.mxu0 0
  %127 = vmatpush2.bf16.msra.mxu0 0
  %128 = vmatprep.subr.bf16.mxu0 0
  %129 = vmatpush2.bf16.msra.mxu0 0
  %130 = vmatprep.subr.bf16.mxu0 0
  %131 = vmatpush2.bf16.msra.mxu0 0
  %132 = vmatprep.subr.bf16.mxu0 0
  %133 = vmatpush2.bf16.msra.mxu0 0
  %134 = vmatprep.subr.bf16.mxu0 0
  %135 = vmatpush2.bf16.msra.mxu0 0
  %136 = vmatprep.subr.bf16.mxu0 0
  %137 = vmatpush2.bf16.msra.mxu0 0
  %138 = vmatprep.mubr.bf16.mxu0 0
  %139 = vmatmul.mubr.bf16.gmra.mxu0 %v97
  %v140 = vpop.f32.mrf.mxu0
  %v141 = vadd.f32 %v43, %v140
  %v142 = vpop.f32.mrf.mxu0
  %v143 = vadd.f32 %v47, %v142
  %v144 = vpop.f32.mrf.mxu0
  %v145 = vpop.f32.mrf.mxu0
  %146 = vdwg.mxu0
  %v147 = vmax.f32 %v141, 0.0
  %v148 = vmax.f32 %v143, 0.0
  %v149 = vpack.c.bf16 %v147, %v147
  %v150 = vpack.c.bf16 %v148, %v148
  %v151 = vld [vmem:[%s3] sm:$0xf]
  %v152 = vld [vmem:[%s3 + $0x4] sm:$0xf]
  %v153 = vld [vmem:[%s3 + $0x8] sm:$0xf]
  %v154 = vld [vmem:[%s3 + $0xc] sm:$0xf]
  %v155 = vld [vmem:[%s3 + $0x10] sm:$0xf]
  %v156 = vld [vmem:[%s3 + $0x14] sm:$0xf]
  %v157 = vld [vmem:[%s3 + $0x18] sm:$0xf]
  %v158 = vld [vmem:[%s3 + $0x1c] sm:$0xf]
  %v159 = vld [vmem:[%s3 + $0x20] sm:$0xf]
  %v160 = vld [vmem:[%s3 + $0x24] sm:$0xf]
  %v161 = vld [vmem:[%s3 + $0x28] sm:$0xf]
  %v162 = vld [vmem:[%s3 + $0x2c] sm:$0xf]
  %v163 = vld [vmem:[%s3 + $0x30] sm:$0xf]
  %v164 = vld [vmem:[%s3 + $0x34] sm:$0xf]
  %v165 = vld [vmem:[%s3 + $0x38] sm:$0xf]
  %v166 = vld [vmem:[%s3 + $0x3c] sm:$0xf]
  %v167 = vld [vmem:[%s3 + $0x40] sm:$0xf]
  %v168 = vld [vmem:[%s3 + $0x44] sm:$0xf]
  %v169 = vld [vmem:[%s3 + $0x48] sm:$0xf]
  %v170 = vld [vmem:[%s3 + $0x4c] sm:$0xf]
  %v171 = vld [vmem:[%s3 + $0x50] sm:$0xf]
  %v172 = vld [vmem:[%s3 + $0x54] sm:$0xf]
  %v173 = vld [vmem:[%s3 + $0x58] sm:$0xf]
  %v174 = vld [vmem:[%s3 + $0x5c] sm:$0xf]
  %v175 = vld [vmem:[%s3 + $0x60] sm:$0xf]
  %v176 = vld [vmem:[%s3 + $0x64] sm:$0xf]
  %v177 = vld [vmem:[%s3 + $0x68] sm:$0xf]
  %v178 = vld [vmem:[%s4] sm:$0x1]
  %v180 = vlaneseq
  %v181 = vshrl.u32 %v180, 7
  %v182 = vsub.s32 0, %v181
  %v183 = vrot.slane %v178, %v182
  %v212 = vunpack.c.l.b16 %v151
  %v213 = vunpack.c.l.b16 %v152
  %v214 = vunpack.c.l.b16 %v153
  %v215 = vunpack.c.l.b16 %v154
  %v216 = vunpack.c.l.b16 %v155
  %v217 = vunpack.c.l.b16 %v156
  %v218 = vunpack.c.l.b16 %v157
  %v219 = vunpack.c.l.b16 %v158
  %v220 = vunpack.c.l.b16 %v159
  %v221 = vunpack.c.l.b16 %v160
  %v222 = vunpack.c.l.b16 %v161
  %v223 = vunpack.c.l.b16 %v162
  %v224 = vunpack.c.l.b16 %v163
  %v225 = vunpack.c.l.b16 %v164
  %v226 = vunpack.c.l.b16 %v165
  %v227 = vunpack.c.l.b16 %v166
  %v228 = vunpack.c.l.b16 %v167
  %v229 = vunpack.c.l.b16 %v168
  %v230 = vunpack.c.l.b16 %v169
  %v231 = vunpack.c.l.b16 %v170
  %v232 = vunpack.c.l.b16 %v171
  %v233 = vunpack.c.l.b16 %v172
  %v234 = vunpack.c.l.b16 %v173
  %v235 = vunpack.c.l.b16 %v174
  %v236 = vunpack.c.l.b16 %v175
  %v237 = vunpack.c.l.b16 %v176
  %v238 = vunpack.c.l.b16 %v177
  %v239 = vpack.c.b16 %v213, %v212
  %v240 = vpack.c.b16 %v215, %v214
  %v241 = vpack.c.b16 %v217, %v216
  %v242 = vpack.c.b16 %v219, %v218
  %v243 = vpack.c.b16 %v221, %v220
  %v244 = vpack.c.b16 %v223, %v222
  %v245 = vpack.c.b16 %v225, %v224
  %v246 = vpack.c.b16 %v227, %v226
  %v247 = vpack.c.b16 %v229, %v228
  %v248 = vpack.c.b16 %v231, %v230
  %v249 = vpack.c.b16 %v233, %v232
  %v250 = vpack.c.b16 %v235, %v234
  %v251 = vpack.c.b16 %v237, %v236
  %v252 = vpack.c.b16 %v238, %v238
  %vm266 = vcmask 719872
  %v268 = vsel %vm266, %v150, 0
  %v271 = vsel %vm99, %v252, 0
  %273 = vmatprep.subr.bf16.mxu0 0
  %274 = vmatpush1.bf16.msra.mxu0 %v246
  %275 = vmatprep.subr.bf16.mxu0 0
  %276 = vmatpush1.bf16.msra.mxu0 %v245
  %277 = vmatprep.subr.bf16.mxu0 0
  %278 = vmatpush1.bf16.msra.mxu0 %v244
  %279 = vmatprep.subr.bf16.mxu0 0
  %280 = vmatpush1.bf16.msra.mxu0 %v243
  %281 = vmatprep.subr.bf16.mxu0 0
  %282 = vmatpush1.bf16.msra.mxu0 %v242
  %283 = vmatprep.subr.bf16.mxu0 0
  %284 = vmatpush1.bf16.msra.mxu0 %v241
  %285 = vmatprep.subr.bf16.mxu0 0
  %286 = vmatpush1.bf16.msra.mxu0 %v240
  %287 = vmatprep.subr.bf16.mxu0 0
  %288 = vmatpush1.bf16.msra.mxu0 %v239
  %289 = vmatprep.subr.bf16.mxu0 0
  %290 = vmatpush2.bf16.msra.mxu0 0
  %291 = vmatprep.subr.bf16.mxu0 0
  %292 = vmatpush2.bf16.msra.mxu0 0
  %293 = vmatprep.subr.bf16.mxu0 0
  %294 = vmatpush2.bf16.msra.mxu0 %v271
  %295 = vmatprep.subr.bf16.mxu0 0
  %296 = vmatpush2.bf16.msra.mxu0 %v251
  %297 = vmatprep.subr.bf16.mxu0 0
  %298 = vmatpush2.bf16.msra.mxu0 %v250
  %299 = vmatprep.subr.bf16.mxu0 0
  %300 = vmatpush2.bf16.msra.mxu0 %v249
  %301 = vmatprep.subr.bf16.mxu0 0
  %302 = vmatpush2.bf16.msra.mxu0 %v248
  %303 = vmatprep.subr.bf16.mxu0 0
  %304 = vmatpush2.bf16.msra.mxu0 %v247
  %305 = vmatprep.mubr.bf16.mxu0 %v268
  %306 = vmatmul.mubr.bf16.gmra.mxu0 %v149
  %v307 = vpop.f32.mrf.mxu0
  %v308 = vadd.f32 %v183, %v307
  %v309 = vpop.f32.mrf.mxu0
  %v310 = vpop.f32.mrf.mxu0
  %v311 = vpop.f32.mrf.mxu0
  %312 = vdwg.mxu0
  %v313 = vmax.f32 %v308, 0.0
  %v314 = vpack.c.bf16 %v313, %v313
  %v315 = vld [vmem:[%s5] sm:$0xf]
  %v316 = vld [vmem:[%s5 + $0x4] sm:$0xf]
  %v317 = vld [vmem:[%s5 + $0x8] sm:$0xf]
  %v318 = vld [vmem:[%s5 + $0xc] sm:$0xf]
  %v319 = vld [vmem:[%s5 + $0x10] sm:$0xf]
  %v320 = vld [vmem:[%s5 + $0x14] sm:$0xf]
  %v321 = vld [vmem:[%s5 + $0x18] sm:$0xf]
  %v322 = vld [vmem:[%s5 + $0x1c] sm:$0xf]
  %v323 = vld [vmem:[%s5 + $0x20] sm:$0xf]
  %v324 = vld [vmem:[%s6] sm:$0x1]
  %v326 = vlaneseq
  %v327 = vshrl.u32 %v326, 7
  %v328 = vsub.s32 0, %v327
  %v329 = vrot.slane %v324, %v328
  %v340 = vunpack.c.l.b16 %v315
  %v341 = vunpack.c.l.b16 %v316
  %v342 = vunpack.c.l.b16 %v317
  %v343 = vunpack.c.l.b16 %v318
  %v344 = vunpack.c.l.b16 %v319
  %v345 = vunpack.c.l.b16 %v320
  %v346 = vunpack.c.l.b16 %v321
  %v347 = vunpack.c.l.b16 %v322
  %v348 = vunpack.c.l.b16 %v323
  %v349 = vpack.c.b16 %v341, %v340
  %v350 = vpack.c.b16 %v343, %v342
  %v351 = vpack.c.b16 %v345, %v344
  %v352 = vpack.c.b16 %v347, %v346
  %v353 = vpack.c.b16 %v348, %v348
  %v359 = vsel %vm95, %v314, 0
  %v362 = vsel %vm99, %v353, 0
  %364 = vmatprep.subr.bf16.mxu0 0
  %365 = vmatpush1.bf16.msra.mxu0 0
  %366 = vmatprep.subr.bf16.mxu0 0
  %367 = vmatpush1.bf16.msra.mxu0 0
  %368 = vmatprep.subr.bf16.mxu0 0
  %369 = vmatpush1.bf16.msra.mxu0 0
  %370 = vmatprep.subr.bf16.mxu0 0
  %371 = vmatpush1.bf16.msra.mxu0 %v362
  %372 = vmatprep.subr.bf16.mxu0 0
  %373 = vmatpush1.bf16.msra.mxu0 %v352
  %374 = vmatprep.subr.bf16.mxu0 0
  %375 = vmatpush1.bf16.msra.mxu0 %v351
  %376 = vmatprep.subr.bf16.mxu0 0
  %377 = vmatpush1.bf16.msra.mxu0 %v350
  %378 = vmatprep.subr.bf16.mxu0 0
  %379 = vmatpush1.bf16.msra.mxu0 %v349
  %380 = vmatprep.subr.bf16.mxu0 0
  %381 = vmatpush2.bf16.msra.mxu0 0
  %382 = vmatprep.subr.bf16.mxu0 0
  %383 = vmatpush2.bf16.msra.mxu0 0
  %384 = vmatprep.subr.bf16.mxu0 0
  %385 = vmatpush2.bf16.msra.mxu0 0
  %386 = vmatprep.subr.bf16.mxu0 0
  %387 = vmatpush2.bf16.msra.mxu0 0
  %388 = vmatprep.subr.bf16.mxu0 0
  %389 = vmatpush2.bf16.msra.mxu0 0
  %390 = vmatprep.subr.bf16.mxu0 0
  %391 = vmatpush2.bf16.msra.mxu0 0
  %392 = vmatprep.subr.bf16.mxu0 0
  %393 = vmatpush2.bf16.msra.mxu0 0
  %394 = vmatprep.subr.bf16.mxu0 0
  %395 = vmatpush2.bf16.msra.mxu0 0
  %396 = vmatprep.mubr.bf16.mxu0 0
  %397 = vmatmul.mubr.bf16.gmra.mxu0 %v359
  %v398 = vpop.f32.mrf.mxu0
  %v399 = vadd.f32 %v329, %v398
  %v400 = vpop.f32.mrf.mxu0
  %v401 = vpop.f32.mrf.mxu0
  %v402 = vpop.f32.mrf.mxu0
  %403 = vdwg.mxu0
  %vm404 = vcmask 189440
  %405 = vst.msk [vmem:[%s7] sm:$0x3] %vm404, %v399
  // Predicated region
  $region30: #{baseconv_forward.1} parent=0 // pred_check
    _
  $region31: #{baseconv_forward.1} parent=0 // pred_check_branch
    %407 = sbr.rel (0) target = $region33
  $region32: #{baseconv_forward.1} parent=0 // pred_region
    _
  $region33: #{baseconv_forward.1} parent=0 // pred_fallthru
    _
  // Predicated region
  $region34: #{baseconv_forward.1} parent=0 // pred_check
    _
  $region35: #{baseconv_forward.1} parent=0 // pred_check_branch
    %409 = sbr.rel (0) target = $region37
  $region36: #{baseconv_forward.1} parent=0 // pred_region
    _
  $region37: #{baseconv_forward.1} parent=0 // pred_fallthru
    _

</llo_original>
